<compile_context>
chip_gen: v7x
topology: tpu7x:2x2x1
jax: 0.10.0
libtpu: 0.0.40
codegen_flags: <defaults>
</compile_context>

<pallas_src>
import functools

import jax
import jax.numpy as jnp
from jax.experimental import pallas as pl
from jax.experimental.pallas import tpu as pltpu

_TB_SMALL = 512
_TB_LARGE = 4096


def _round_up(n, m):
    return -(-n // m) * m


def _pick_tb(batch):
    """Batch tile from a fixed set (bounded recompiles); clamped only for tiny batches."""
    if batch >= 4 * _TB_LARGE:          # >= 4 grid steps -> both v7x TCs stay busy
        return _TB_LARGE
    return min(_TB_SMALL, _round_up(batch, 8))


# ---------------------------------------------------------------------------
# Pallas kernels
# ---------------------------------------------------------------------------
def _proj_kernel(x_ref, w_ref, b_ref, out_ref):
    # Continuous-only path: out = x @ W + b.
    y = jnp.dot(x_ref[...], w_ref[...], preferred_element_type=jnp.float32)
    out_ref[...] = (y + b_ref[...]).astype(out_ref.dtype)


def _make_cat_kernel(offsets, total_card):
    """Fused kernel: out = cont @ Wc + onehot(ids) @ (embed @ Wk) + (bc + bk)."""
    offsets = tuple(int(o) for o in offsets)
    total_card = int(total_card)

    def kernel(cont_ref, ids_ref, wc_ref, tbl_ref, b_ref, out_ref):
        tb = out_ref.shape[0]
        # Continuous projection on the MXU.
        y = jnp.dot(cont_ref[...], wc_ref[...],
                    preferred_element_type=jnp.float32)
        # Categorical contribution: build a multi-hot row-selector over the
        # concatenated fused (embed @ Wk) tables and hit the MXU once. Rows
        # past the valid batch edge (partial last block) compute garbage but
        # are masked by Pallas on write-back.
        ids = ids_ref[...]                                   # (tb, n_cat) int32
        lane = jax.lax.broadcasted_iota(jnp.int32, (tb, total_card), 1)
        sel = jnp.zeros((tb, total_card), jnp.float32)
        for i, off in enumerate(offsets):                    # n_cat is tiny & static
            sel = sel + (lane == (ids[:, i:i + 1] + off)).astype(jnp.float32)
        y = y + jnp.dot(sel, tbl_ref[...], preferred_element_type=jnp.float32)
        out_ref[...] = (y + b_ref[...]).astype(out_ref.dtype)

    return kernel


def _mosaic_params():
    return pltpu.CompilerParams(
        dimension_semantics=("parallel",),   # batch tiles shard across v7x TCs
        vmem_limit_bytes=32 << 20)


# ---------------------------------------------------------------------------
# Jitted forward wrappers (kernel + attention-map broadcast under one jit)
# ---------------------------------------------------------------------------
@functools.partial(
    jax.jit, static_argnames=("tb", "depth", "heads", "offsets", "total_card"))
def _forward_with_cat(continuous, categorical, wc, fused_tbl, b_full,
                      attn_weights, *, tb, depth, heads, offsets, total_card):
    B, K = continuous.shape
    n_cat = categorical.shape[1]
    dim = wc.shape[1]
    flops = 2 * B * (K + total_card) * dim
    bytes_accessed = 4 * (B * K + B * n_cat + K * dim + total_card * dim
                          + dim + B * dim)
    feats = pl.pallas_call(
        _make_cat_kernel(offsets, total_card),
        out_shape=jax.ShapeDtypeStruct((B, dim), jnp.float32),
        grid_spec=pltpu.PrefetchScalarGridSpec(
            num_scalar_prefetch=0,
            grid=(pl.cdiv(B, tb),),          # partial last block handled by Pallas
            in_specs=[
                # Batch-tiled streams (double-buffered by Pallas).
                pl.BlockSpec((tb, K), lambda i: (i, 0)),
                pl.BlockSpec((tb, n_cat), lambda i: (i, 0)),
                # Grid-invariant, VMEM-resident weights / fused table / bias.
                pl.BlockSpec((K, dim), lambda i: (0, 0)),
                pl.BlockSpec((total_card, dim), lambda i: (0, 0)),
                pl.BlockSpec((1, dim), lambda i: (0, 0)),
            ],
            # Lane-dense output (last dim = dim = 128) -> unmasked stores.
            out_specs=pl.BlockSpec((tb, dim), lambda i: (i, 0)),
        ),
        compiler_params=_mosaic_params(),
        cost_estimate=pl.CostEstimate(
            flops=int(flops), transcendentals=0,
            bytes_accessed=int(bytes_accessed)),
    )(continuous, categorical.astype(jnp.int32), wc, fused_tbl, b_full)
    attention_maps = jnp.broadcast_to(
        attn_weights[:, None], (depth, B, heads, 1, 1))
    return feats, attention_maps


@functools.partial(jax.jit, static_argnames=("tb", "depth", "heads"))
def _forward_cont_only(continuous, wc, bc, attn_weights, *, tb, depth, heads):
    B, K = continuous.shape
    dim = wc.shape[1]
    feats = pl.pallas_call(
        _proj_kernel,
        out_shape=jax.ShapeDtypeStruct((B, dim), jnp.float32),
        grid_spec=pltpu.PrefetchScalarGridSpec(
            num_scalar_prefetch=0,
            grid=(pl.cdiv(B, tb),),
            in_specs=[
                pl.BlockSpec((tb, K), lambda i: (i, 0)),
                pl.BlockSpec((K, dim), lambda i: (0, 0)),
                pl.BlockSpec((1, dim), lambda i: (0, 0)),
            ],
            out_specs=pl.BlockSpec((tb, dim), lambda i: (i, 0)),
        ),
        compiler_params=_mosaic_params(),
        cost_estimate=pl.CostEstimate(
            flops=int(2 * B * K * dim), transcendentals=0,
            bytes_accessed=int(4 * (B * K + K * dim + dim + B * dim))),
    )(continuous, wc, bc)
    attention_maps = jnp.broadcast_to(
        attn_weights[:, None], (depth, B, heads, 1, 1))
    return feats, attention_maps


# ---------------------------------------------------------------------------
# Module (parameters + forward wrapper)
# ---------------------------------------------------------------------------
class MockTabularTransformerPallas:
    def __init__(self, num_continuous, cat_feat_info=None, dim=128, depth=4,
                 heads=8, pool='attention', feature_interaction=True, *, key):
        self.num_continuous = num_continuous
        self.cat_feat_info = cat_feat_info or []
        self.dim = dim
        self.depth = depth
        self.heads = heads
        self.pool = pool
        self.feature_interaction = feature_interaction

        keys = jax.random.split(key, 4 + max(1, len(self.cat_feat_info)))

        # cont_proj: Linear(num_continuous, dim), stored (in, out).
        self.wc = jax.random.normal(keys[0], (num_continuous, dim), jnp.float32) * 0.02
        self.bc = jax.random.normal(keys[1], (1, dim), jnp.float32) * 0.02

        # Categorical embedding tables.
        self.cat_embed_tables = []
        for i, feat in enumerate(self.cat_feat_info):
            tbl = jax.random.normal(
                keys[4 + i], (feat['cardinality'], feat['embed_dim']),
                jnp.float32) * 0.02
            self.cat_embed_tables.append(tbl)

        if self.cat_feat_info:
            total_embed = sum(f['embed_dim'] for f in self.cat_feat_info)
            self.wk = jax.random.normal(keys[2], (total_embed, dim), jnp.float32) * 0.02
            self.bk = jax.random.normal(keys[3], (1, dim), jnp.float32) * 0.02
            # Fold each embedding table through cat_proj once (exact f32):
            #   gather(embed_i)[ids] @ Wk[rows_i] == gather(embed_i @ Wk[rows_i])[ids]
            # so the kernel only needs the fused (cardinality_i, dim) tables.
            fused, row = [], 0
            for tbl, feat in zip(self.cat_embed_tables, self.cat_feat_info):
                d = feat['embed_dim']
                fused.append(jnp.dot(tbl, self.wk[row:row + d],
                                     precision=jax.lax.Precision.HIGHEST))
                row += d
            card_off, acc = [], 0
            for feat in self.cat_feat_info:
                card_off.append(acc)
                acc += feat['cardinality']
            self.fused_tbl = jnp.concatenate(fused, axis=0)   # (total_card, dim)
            self.cat_offsets = tuple(card_off)
            self.total_card = acc
            self.b_full = self.bc + self.bk                   # bias folded once
        else:
            self.wk = None
            self.bk = None
            self.fused_tbl = None
            self.cat_offsets = ()
            self.total_card = 0
            self.b_full = None

        # attn_weights = ones(depth, heads, 1, 1) (matches torch.ones init).
        self.attn_weights = jnp.ones((depth, heads, 1, 1), jnp.float32)

    def __call__(self, continuous, categorical=None, missing_mask=None):
        # TODO(synk): missing_mask is unused by the reference module; ignored here too.
        tb = _pick_tb(continuous.shape[0])
        if categorical is not None and len(self.cat_feat_info) > 0:
            feats, maps = _forward_with_cat(
                continuous, categorical, self.wc, self.fused_tbl, self.b_full,
                self.attn_weights, tb=tb, depth=self.depth, heads=self.heads,
                offsets=self.cat_offsets, total_card=self.total_card)
        else:
            feats, maps = _forward_cont_only(
                continuous, self.wc, self.bc, self.attn_weights,
                tb=tb, depth=self.depth, heads=self.heads)
        return feats, [maps[l] for l in range(self.depth)]


# ---------------------------------------------------------------------------
# Demo / smoke test
# ---------------------------------------------------------------------------
if __name__ == "__main__":
    key = jax.random.PRNGKey(0)
    k_model, k_cont, k_cat, k_cont2, k_cat2 = jax.random.split(key, 5)

    num_continuous = 8
    cat_feat_info = [
        {'cardinality': 10, 'embed_dim': 4},
        {'cardinality': 7, 'embed_dim': 6},
    ]
    dim, depth, heads = 128, 4, 8
    batch = 8

    model = MockTabularTransformerPallas(
        num_continuous, cat_feat_info, dim=dim, depth=depth, heads=heads,
        key=k_model)

    continuous = jax.random.normal(k_cont, (batch, num_continuous), jnp.float32)
    categorical = jnp.stack(
        [jax.random.randint(jax.random.fold_in(k_cat, i), (batch,), 0,
                            cat_feat_info[i]['cardinality'])
         for i in range(len(cat_feat_info))],
        axis=1).astype(jnp.int32)

    features, attention_maps = model(continuous, categorical)
    features = jax.block_until_ready(features)
    attention_maps = [jax.block_until_ready(a) for a in attention_maps]

    # Reference: plain-JAX math with the module's original (gather -> concat ->
    # project) formulation. Tolerance allows for TPU default matmul rounding
    # between the fused-table and gather-then-project paths; real bugs (wrong
    # offsets / bias / masking) would be O(1e-2)+.
    cat_embs = [jnp.take(t, categorical[:, i], axis=0)
                for i, t in enumerate(model.cat_embed_tables)]
    cat_concat = jnp.concatenate(cat_embs, axis=1)
    ref = (continuous @ model.wc + model.bc) + (cat_concat @ model.wk + model.bk)
    assert features.shape == (batch, dim)
    assert jnp.allclose(features, ref, atol=1e-4, rtol=1e-4), \
        float(jnp.max(jnp.abs(features - ref)))
    assert len(attention_maps) == depth
    assert all(a.shape == (batch, heads, 1, 1) for a in attention_maps)
    assert all(jnp.all(a == 1.0) for a in attention_maps)

    # Masked-edge path: batch not a multiple of the tile (grid = 3, last block
    # only partially valid) -> exercises Pallas' partial-block write masking.
    batch2 = 40
    cont2 = jax.random.normal(k_cont2, (batch2, num_continuous), jnp.float32)
    cat2 = jnp.stack(
        [jax.random.randint(jax.random.fold_in(k_cat2, i), (batch2,), 0,
                            cat_feat_info[i]['cardinality'])
         for i in range(len(cat_feat_info))],
        axis=1).astype(jnp.int32)
    feats2, _ = _forward_with_cat(
        cont2, cat2, model.wc, model.fused_tbl, model.b_full,
        model.attn_weights, tb=16, depth=depth, heads=heads,
        offsets=model.cat_offsets, total_card=model.total_card)
    feats2 = jax.block_until_ready(feats2)
    cat_embs2 = [jnp.take(t, cat2[:, i], axis=0)
                 for i, t in enumerate(model.cat_embed_tables)]
    cat_concat2 = jnp.concatenate(cat_embs2, axis=1)
    ref2 = (cont2 @ model.wc + model.bc) + (cat_concat2 @ model.wk + model.bk)
    assert feats2.shape == (batch2, dim)
    assert jnp.allclose(feats2, ref2, atol=1e-4, rtol=1e-4), \
        float(jnp.max(jnp.abs(feats2 - ref2)))

    # No-categorical path.
    feats_only, _ = model(continuous, None)
    feats_only = jax.block_until_ready(feats_only)
    assert jnp.allclose(feats_only, continuous @ model.wc + model.bc,
                        atol=1e-4, rtol=1e-4)

    print("KERNEL_OK")
</pallas_src>

<mosaic_0001>
module attributes {stable_mosaic.version = 11 : i64} {
  func.func @kernel(%arg0: i32, %arg1: memref<8x8xf32, #tpu.memory_space<vmem>>, %arg2: memref<8x2xi32, #tpu.memory_space<vmem>>, %arg3: memref<8x128xf32, #tpu.memory_space<vmem>>, %arg4: memref<17x128xf32, #tpu.memory_space<vmem>>, %arg5: memref<1x128xf32, #tpu.memory_space<vmem>>, %arg6: memref<8x128xf32, #tpu.memory_space<vmem>>) attributes {dimension_semantics = [#tpu.dimension_semantics<parallel>], iteration_bounds = array<i64: 1>, scalar_prefetch = 0 : i64, scratch_operands = 0 : i64, tpu.core_type = #tpu.core_type<tc>, window_params = [{transform_indices = @transform_0, window_bounds = array<i64: 8, 8>}, {transform_indices = @transform_1, window_bounds = array<i64: 8, 2>}, {pipeline_mode = #tpu.pipeline_mode<synchronous>, transform_indices = @transform_2, window_bounds = array<i64: 8, 128>}, {pipeline_mode = #tpu.pipeline_mode<synchronous>, transform_indices = @transform_3, window_bounds = array<i64: 17, 128>}, {pipeline_mode = #tpu.pipeline_mode<synchronous>, transform_indices = @transform_4, window_bounds = array<i64: 1, 128>}, {transform_indices = @transform_5, window_bounds = array<i64: 8, 128>}]} {
    %c0 = arith.constant 0 : index
    %c0_0 = arith.constant 0 : index
    %0 = vector.load %arg1[%c0, %c0_0] : memref<8x8xf32, #tpu.memory_space<vmem>>, vector<8x8xf32>
    %c0_1 = arith.constant 0 : index
    %c0_2 = arith.constant 0 : index
    %1 = vector.load %arg3[%c0_1, %c0_2] : memref<8x128xf32, #tpu.memory_space<vmem>>, vector<8x128xf32>
    %cst = arith.constant dense<0.000000e+00> : vector<8x128xf32>
    %2 = tpu.matmul %0, %1, %cst {dimension_numbers = #tpu.dot_dimension_numbers<[1], [0], [0], [1], [0, 0, 1, 1], [], []>} : vector<8x8xf32>, vector<8x128xf32>, vector<8x128xf32> -> vector<8x128xf32>
    %c0_3 = arith.constant 0 : index
    %c0_4 = arith.constant 0 : index
    %3 = vector.load %arg2[%c0_3, %c0_4] : memref<8x2xi32, #tpu.memory_space<vmem>>, vector<8x2xi32>
    %4 = tpu.iota {dimensions = array<i32: 1>} : vector<8x17xi32>
    %cst_5 = arith.constant 0.000000e+00 : f32
    %5 = vector.broadcast %cst_5 : f32 to vector<8x17xf32>
    %6 = vector.extract_strided_slice %3 {offsets = [0, 0], sizes = [8, 1], strides = [1, 1]} : vector<8x2xi32> to vector<8x1xi32>
    %c0_i32 = arith.constant 0 : i32
    %7 = vector.broadcast %c0_i32 : i32 to vector<8x1xi32>
    %8 = arith.addi %6, %7 : vector<8x1xi32>
    %9 = vector.broadcast %8 : vector<8x1xi32> to vector<8x17xi32>
    %10 = arith.cmpi eq, %4, %9 : vector<8x17xi32>
    %11 = arith.extui %10 : vector<8x17xi1> to vector<8x17xi32>
    %12 = arith.sitofp %11 : vector<8x17xi32> to vector<8x17xf32>
    %13 = arith.addf %5, %12 : vector<8x17xf32>
    %14 = vector.extract_strided_slice %3 {offsets = [0, 1], sizes = [8, 1], strides = [1, 1]} : vector<8x2xi32> to vector<8x1xi32>
    %c10_i32 = arith.constant 10 : i32
    %15 = vector.broadcast %c10_i32 : i32 to vector<8x1xi32>
    %16 = arith.addi %14, %15 : vector<8x1xi32>
    %17 = vector.broadcast %16 : vector<8x1xi32> to vector<8x17xi32>
    %18 = arith.cmpi eq, %4, %17 : vector<8x17xi32>
    %19 = arith.extui %18 : vector<8x17xi1> to vector<8x17xi32>
    %20 = arith.sitofp %19 : vector<8x17xi32> to vector<8x17xf32>
    %21 = arith.addf %13, %20 : vector<8x17xf32>
    %c0_6 = arith.constant 0 : index
    %c0_7 = arith.constant 0 : index
    %22 = vector.load %arg4[%c0_6, %c0_7] : memref<17x128xf32, #tpu.memory_space<vmem>>, vector<17x128xf32>
    %cst_8 = arith.constant dense<0.000000e+00> : vector<8x128xf32>
    %23 = tpu.matmul %21, %22, %cst_8 {dimension_numbers = #tpu.dot_dimension_numbers<[1], [0], [0], [1], [0, 0, 1, 1], [], []>} : vector<8x17xf32>, vector<17x128xf32>, vector<8x128xf32> -> vector<8x128xf32>
    %24 = arith.addf %2, %23 : vector<8x128xf32>
    %c0_9 = arith.constant 0 : index
    %c0_10 = arith.constant 0 : index
    %25 = vector.load %arg5[%c0_9, %c0_10] : memref<1x128xf32, #tpu.memory_space<vmem>>, vector<1x128xf32>
    %26 = vector.broadcast %25 : vector<1x128xf32> to vector<8x128xf32>
    %27 = arith.addf %24, %26 : vector<8x128xf32>
    %c0_11 = arith.constant 0 : index
    %c0_12 = arith.constant 0 : index
    %28 = vector.load %arg6[%c0_11, %c0_12] : memref<8x128xf32, #tpu.memory_space<vmem>>, vector<8x128xf32>
    tpu.vector_store %arg6[%c0_11, %c0_12], %27 {strides = array<i32>} : memref<8x128xf32, #tpu.memory_space<vmem>>, vector<8x128xf32>,
    return
  }
  func.func @transform_0(%arg0: i32) -> (i32, i32) {
    %c0_i32 = arith.constant 0 : i32
    %c0_i32_0 = arith.constant 0 : i32
    return %arg0, %c0_i32 : i32, i32
  }
  func.func @transform_1(%arg0: i32) -> (i32, i32) {
    %c0_i32 = arith.constant 0 : i32
    %c0_i32_0 = arith.constant 0 : i32
    return %arg0, %c0_i32 : i32, i32
  }
  func.func @transform_2(%arg0: i32) -> (i32, i32) {
    %c0_i32 = arith.constant 0 : i32
    %c0_i32_0 = arith.constant 0 : i32
    %c0_i32_1 = arith.constant 0 : i32
    return %c0_i32, %c0_i32_0 : i32, i32
  }
  func.func @transform_3(%arg0: i32) -> (i32, i32) {
    %c0_i32 = arith.constant 0 : i32
    %c0_i32_0 = arith.constant 0 : i32
    %c0_i32_1 = arith.constant 0 : i32
    return %c0_i32, %c0_i32_0 : i32, i32
  }
  func.func @transform_4(%arg0: i32) -> (i32, i32) {
    %c0_i32 = arith.constant 0 : i32
    %c0_i32_0 = arith.constant 0 : i32
    %c0_i32_1 = arith.constant 0 : i32
    return %c0_i32, %c0_i32_0 : i32, i32
  }
  func.func @transform_5(%arg0: i32) -> (i32, i32) {
    %c0_i32 = arith.constant 0 : i32
    %c0_i32_0 = arith.constant 0 : i32
    return %arg0, %c0_i32 : i32, i32
  }
}

</mosaic_0001>

<llo_original>
// kernel: _forward_with_cat.1
$region0: #{_forward_with_cat.1}
  #allocation0 [shape = 'u32[]', space=smem, size = 0x4, offset = 0x4, fixed_abs, tag = 'smem constant byte address 0x4 - core index']
  #allocation1 [shape = 'u32[144,128]{1,0:T(1,128)}', space=vmem, size = 0x12000, scoped, tag = 'internal scratch']
  %s0 = inlined_call_operand.hbm [shape: f32[8,8], index: 0, kind: input, shape index: {}]
  %s1 = inlined_call_operand.vmem [shape: s32[8,2], index: 1, kind: input, shape index: {}]
  %s2 = inlined_call_operand.hbm [shape: f32[8,128], index: 2, kind: input, shape index: {}]
  %s3 = inlined_call_operand.vmem [shape: f32[17,128], index: 3, kind: input, shape index: {}]
  %s4 = inlined_call_operand.vmem [shape: f32[1,128], index: 4, kind: input, shape index: {}]
  %s5 = inlined_call_operand.hbm [shape: f32[8,128], index: 5, kind: output, shape index: {}]
  %s6 = sld [smem:[#allocation0]]
  $region38: #{_forward_with_cat.1} parent=0
    _
  %s8 = ssub.s32 1, %s6
  %s9 = scalar_select 0, %s8, %s6
  $region1: #{_forward_with_cat.1} parent=0
    #allocation2 [shape = 'u8[4096]{0}', space=vmem, size = 0x1000, scoped, tag = 'input window, operand 0, single buffered']
    #allocation3 [shape = 's32[1]{0}', space=sflag, size = 0x4, scoped, tag = 'scoped memory for _forward_with_cat.1']
    #allocation4 [shape = 's32[1]{0}', space=sflag, size = 0x4, scoped, tag = 'scoped memory for _forward_with_cat.1']
    #allocation5 [shape = 'u8[4096]{0}', space=vmem, size = 0x1000, scoped, tag = 'input window, operand 2, single buffered']
    #allocation6 [shape = 's32[1]{0}', space=sflag, size = 0x4, scoped, tag = 'scoped memory for _forward_with_cat.1']
    #allocation7 [shape = 'u8[4096]{0}', space=vmem, size = 0x1000, scoped, tag = 'output window, operand 0, single buffered']
    %10 = vsyncpa [#allocation3], 0
    %11 = vsyncpa [#allocation6], 0
    %12 = vsyncpa [#allocation4], 0
    // Predicated region
    $region2: #{_forward_with_cat.1} parent=1 // pred_check
      _
    $region3: #{_forward_with_cat.1} parent=1 // pred_check_branch
      %14 = sbr.rel (0) target = $region5
    $region4: #{_forward_with_cat.1} parent=1 // pred_region
      %s16 = ssub.s32 128, 128
      %17 = vsyncadd [#allocation3], %s16
      %s19 = sshll.u32 [#allocation2], 4
      %s20 = int_to_ptr.vmem [resolvable:$true] %s19
      %22 = dma.hbm_to_vmem [thread:$0]  %s0, 128, %s20, [#allocation3]
    $region5: #{_forward_with_cat.1} parent=1 // pred_fallthru
      _
    // Predicated region
    $region6: #{_forward_with_cat.1} parent=1 // pred_check
      _
    $region7: #{_forward_with_cat.1} parent=1 // pred_check_branch
      %24 = sbr.rel (0) target = $region9
    $region8: #{_forward_with_cat.1} parent=1 // pred_region
      _
    $region9: #{_forward_with_cat.1} parent=1 // pred_fallthru
      _
    // Predicated region
    $region10: #{_forward_with_cat.1} parent=1 // pred_check
      _
    $region11: #{_forward_with_cat.1} parent=1 // pred_check_branch
      %26 = sbr.rel (0) target = $region13
    $region12: #{_forward_with_cat.1} parent=1 // pred_region
      %s28 = ssub.s32 128, 128
      %29 = vsyncadd [#allocation6], %s28
      %s31 = sshll.u32 [#allocation5], 4
      %s32 = int_to_ptr.vmem [resolvable:$true] %s31
      %34 = dma.hbm_to_vmem [thread:$0]  %s2, 128, %s32, [#allocation6]
    $region13: #{_forward_with_cat.1} parent=1 // pred_fallthru
      _
    // Predicated region
    $region14: #{_forward_with_cat.1} parent=1 // pred_check
      _
    $region15: #{_forward_with_cat.1} parent=1 // pred_check_branch
      %36 = sbr.rel (0) target = $region17
    $region16: #{_forward_with_cat.1} parent=1 // pred_region
      _
    $region17: #{_forward_with_cat.1} parent=1 // pred_fallthru
      _
    // Predicated region
    $region18: #{_forward_with_cat.1} parent=1 // pred_check
      _
    $region19: #{_forward_with_cat.1} parent=1 // pred_check_branch
      %38 = sbr.rel (0) target = $region21
    $region20: #{_forward_with_cat.1} parent=1 // pred_region
      _
    $region21: #{_forward_with_cat.1} parent=1 // pred_fallthru
      _
    // Predicated region
    $region22: #{_forward_with_cat.1} parent=1 // pred_check
      _
    $region23: #{_forward_with_cat.1} parent=1 // pred_check_branch
      %40 = sbr.rel (0) target = $region25
    $region24: #{_forward_with_cat.1} parent=1 // pred_region
      %41 = dma.done [#allocation3], 128
    $region25: #{_forward_with_cat.1} parent=1 // pred_fallthru
      _
    // Predicated region
    $region26: #{_forward_with_cat.1} parent=1 // pred_check
      _
    $region27: #{_forward_with_cat.1} parent=1 // pred_check_branch
      %43 = sbr.rel (0) target = $region29
    $region28: #{_forward_with_cat.1} parent=1 // pred_region
      %44 = dma.done [#allocation6], 128
    $region29: #{_forward_with_cat.1} parent=1 // pred_fallthru
      _
    %v45 = vld [vmem:[#allocation2] sm:$0xff]
    %v46 = vld [vmem:[#allocation5] sm:$0xff]
    %v47 = vld [vmem:[%s1] sm:$0xff]
    %v48 = vlaneseq
    %v49 = vand.u32 %v48, 127
    %50 = vset.pattern.permute.xlu0 0
    %51 = vperm.xlu0 %50, %v47
    %v52 = vpop.permute.xlu0 %51
    %vm53 = vcmp.eq.s32.totalorder %v49, %v52
    %v54 = vsel %vm53, 1, 0
    %v55 = vcvt.s32.f32 %v54
    %v56 = vadd.f32 %v55, 0.0
    %v57 = vadd.s32 %v47, 10
    %58 = vset.pattern.permute.xlu0 1
    %59 = vperm.xlu0 %58, %v57
    %v60 = vpop.permute.xlu0 %59
    %vm61 = vcmp.eq.s32.totalorder %v49, %v60
    %v62 = vsel %vm61, 1, 0
    %v63 = vcvt.s32.f32 %v62
    %v64 = vadd.f32 %v56, %v63
    %v65 = vld [vmem:[%s3] sm:$0xff]
    %v66 = vld [vmem:[%s3 + $0x8] sm:$0xff]
    %v67 = vld [vmem:[%s3 + $0x10] sm:$0x1]
    %vm68 = vcmask 138240
    %v70 = vsel %vm68, %v64, 0
    %vm72 = vcmask 1040384
    %v74 = vsel %vm72, %v67, 0
    %76 = vmatprep.subr.mxu0 0.0
    %77 = vmatpush1.msra.mxu0 %v65
    %78 = vmatprep.subr.mxu0 0.0
    %79 = vmatpush1.msra.mxu0 %v66
    %80 = vmatprep.subr.mxu0 0.0
    %81 = vmatpush1.msra.mxu0 %v74
    %82 = vmatprep.subr.mxu0 0.0
    %83 = vmatpush1.msra.mxu0 0.0
    %84 = vmatprep.subr.mxu0 0.0
    %85 = vmatpush1.msra.mxu0 0.0
    %86 = vmatprep.subr.mxu0 0.0
    %87 = vmatpush1.msra.mxu0 0.0
    %88 = vmatprep.subr.mxu0 0.0
    %89 = vmatpush1.msra.mxu0 0.0
    %90 = vmatprep.subr.mxu0 0.0
    %91 = vmatpush1.msra.mxu0 0.0
    %92 = vmatprep.subr.mxu0 0.0
    %93 = vmatpush1.msra.mxu0 0.0
    %94 = vmatprep.subr.mxu0 0.0
    %95 = vmatpush1.msra.mxu0 0.0
    %96 = vmatprep.subr.mxu0 0.0
    %97 = vmatpush1.msra.mxu0 0.0
    %98 = vmatprep.subr.mxu0 0.0
    %99 = vmatpush1.msra.mxu0 0.0
    %100 = vmatprep.subr.mxu0 0.0
    %101 = vmatpush1.msra.mxu0 0.0
    %102 = vmatprep.subr.mxu0 0.0
    %103 = vmatpush1.msra.mxu0 0.0
    %104 = vmatprep.subr.mxu0 0.0
    %105 = vmatpush1.msra.mxu0 0.0
    %106 = vmatprep.subr.mxu0 0.0
    %107 = vmatpush1.msra.mxu0 0.0
    %108 = vmatprep.subr.mxu0 0.0
    %109 = vmatpush1.msra.mxu0 0.0
    %110 = vmatprep.subr.mxu0 0.0
    %111 = vmatpush1.msra.mxu0 0.0
    %112 = vmatprep.subr.mxu0 0.0
    %113 = vmatpush1.msra.mxu0 0.0
    %114 = vmatprep.subr.mxu0 0.0
    %115 = vmatpush1.msra.mxu0 0.0
    %116 = vmatprep.subr.mxu0 0.0
    %117 = vmatpush1.msra.mxu0 0.0
    %118 = vmatprep.subr.mxu0 0.0
    %119 = vmatpush1.msra.mxu0 0.0
    %120 = vmatprep.subr.mxu0 0.0
    %121 = vmatpush1.msra.mxu0 0.0
    %122 = vmatprep.subr.mxu0 0.0
    %123 = vmatpush1.msra.mxu0 0.0
    %124 = vmatprep.subr.mxu0 0.0
    %125 = vmatpush1.msra.mxu0 0.0
    %126 = vmatprep.subr.mxu0 0.0
    %127 = vmatpush1.msra.mxu0 0.0
    %128 = vmatprep.subr.mxu0 0.0
    %129 = vmatpush1.msra.mxu0 0.0
    %130 = vmatprep.subr.mxu0 0.0
    %131 = vmatpush1.msra.mxu0 0.0
    %132 = vmatprep.subr.mxu0 0.0
    %133 = vmatpush1.msra.mxu0 0.0
    %134 = vmatprep.subr.mxu0 0.0
    %135 = vmatpush1.msra.mxu0 0.0
    %136 = vmatprep.subr.mxu0 0.0
    %137 = vmatpush1.msra.mxu0 0.0
    %138 = vmatprep.subr.mxu0 0.0
    %139 = vmatpush1.msra.mxu0 0.0
    %140 = vmatprep.mubr.f32.mxu0 0.0
    %141 = vmatmul.mubr.f32.gmra.mrb[0].mxu0 %v70
    %v142 = vpop.f32.mrb[0].mxu0
    %v143 = vadd.f32 0.0, %v142
    %v144 = vpop.f32.mrb[0].mxu0
    %145 = vdwg.mxu0
    %vm146 = vcmask 64512
    %v148 = vsel %vm146, %v45, 0
    %150 = vmatprep.subr.mxu0 0.0
    %151 = vmatpush1.msra.mxu0 %v46
    %152 = vmatprep.subr.mxu0 0.0
    %153 = vmatpush1.msra.mxu0 0.0
    %154 = vmatprep.subr.mxu0 0.0
    %155 = vmatpush1.msra.mxu0 0.0
    %156 = vmatprep.subr.mxu0 0.0
    %157 = vmatpush1.msra.mxu0 0.0
    %158 = vmatprep.subr.mxu0 0.0
    %159 = vmatpush1.msra.mxu0 0.0
    %160 = vmatprep.subr.mxu0 0.0
    %161 = vmatpush1.msra.mxu0 0.0
    %162 = vmatprep.subr.mxu0 0.0
    %163 = vmatpush1.msra.mxu0 0.0
    %164 = vmatprep.subr.mxu0 0.0
    %165 = vmatpush1.msra.mxu0 0.0
    %166 = vmatprep.subr.mxu0 0.0
    %167 = vmatpush1.msra.mxu0 0.0
    %168 = vmatprep.subr.mxu0 0.0
    %169 = vmatpush1.msra.mxu0 0.0
    %170 = vmatprep.subr.mxu0 0.0
    %171 = vmatpush1.msra.mxu0 0.0
    %172 = vmatprep.subr.mxu0 0.0
    %173 = vmatpush1.msra.mxu0 0.0
    %174 = vmatprep.subr.mxu0 0.0
    %175 = vmatpush1.msra.mxu0 0.0
    %176 = vmatprep.subr.mxu0 0.0
    %177 = vmatpush1.msra.mxu0 0.0
    %178 = vmatprep.subr.mxu0 0.0
    %179 = vmatpush1.msra.mxu0 0.0
    %180 = vmatprep.subr.mxu0 0.0
    %181 = vmatpush1.msra.mxu0 0.0
    %182 = vmatprep.subr.mxu0 0.0
    %183 = vmatpush1.msra.mxu0 0.0
    %184 = vmatprep.subr.mxu0 0.0
    %185 = vmatpush1.msra.mxu0 0.0
    %186 = vmatprep.subr.mxu0 0.0
    %187 = vmatpush1.msra.mxu0 0.0
    %188 = vmatprep.subr.mxu0 0.0
    %189 = vmatpush1.msra.mxu0 0.0
    %190 = vmatprep.subr.mxu0 0.0
    %191 = vmatpush1.msra.mxu0 0.0
    %192 = vmatprep.subr.mxu0 0.0
    %193 = vmatpush1.msra.mxu0 0.0
    %194 = vmatprep.subr.mxu0 0.0
    %195 = vmatpush1.msra.mxu0 0.0
    %196 = vmatprep.subr.mxu0 0.0
    %197 = vmatpush1.msra.mxu0 0.0
    %198 = vmatprep.subr.mxu0 0.0
    %199 = vmatpush1.msra.mxu0 0.0
    %200 = vmatprep.subr.mxu0 0.0
    %201 = vmatpush1.msra.mxu0 0.0
    %202 = vmatprep.subr.mxu0 0.0
    %203 = vmatpush1.msra.mxu0 0.0
    %204 = vmatprep.subr.mxu0 0.0
    %205 = vmatpush1.msra.mxu0 0.0
    %206 = vmatprep.subr.mxu0 0.0
    %207 = vmatpush1.msra.mxu0 0.0
    %208 = vmatprep.subr.mxu0 0.0
    %209 = vmatpush1.msra.mxu0 0.0
    %210 = vmatprep.subr.mxu0 0.0
    %211 = vmatpush1.msra.mxu0 0.0
    %212 = vmatprep.subr.mxu0 0.0
    %213 = vmatpush1.msra.mxu0 0.0
    %214 = vmatprep.mubr.f32.mxu0 0.0
    %215 = vmatmul.mubr.f32.gmra.mrb[0].mxu0 %v148
    %v216 = vpop.f32.mrb[0].mxu0
    %v217 = vadd.f32 %v143, %v216
    %v218 = vpop.f32.mrb[0].mxu0
    %219 = vdwg.mxu0
    %v220 = vld [vmem:[%s4] sm:$0x1]
    %v222 = vlaneseq
    %v223 = vshrl.u32 %v222, 7
    %v224 = vsub.s32 0, %v223
    %v225 = vrot.slane %v220, %v224
    %v227 = vadd.f32 %v217, %v225
    %228 = vst [vmem:[#allocation7] sm:$0xff] %v227
    // Predicated region
    $region30: #{_forward_with_cat.1} parent=1 // pred_check
      _
    $region31: #{_forward_with_cat.1} parent=1 // pred_check_branch
      %230 = sbr.rel (0) target = $region33
    $region32: #{_forward_with_cat.1} parent=1 // pred_region
      %s232 = ssub.s32 128, 128
      %233 = vsyncadd [#allocation4], %s232
      %s235 = sshll.u32 [#allocation7], 4
      %s236 = int_to_ptr.vmem [resolvable:$true] %s235
      %238 = dma.vmem_to_hbm [thread:$0]  %s236, 128, %s5, [#allocation4]
    $region33: #{_forward_with_cat.1} parent=1 // pred_fallthru
      _
    // Predicated region
    $region34: #{_forward_with_cat.1} parent=1 // pred_check
      _
    $region35: #{_forward_with_cat.1} parent=1 // pred_check_branch
      %240 = sbr.rel (0) target = $region37
    $region36: #{_forward_with_cat.1} parent=1 // pred_region
      %241 = dma.done [#allocation4], 128
    $region37: #{_forward_with_cat.1} parent=1 // pred_fallthru
      _
    %242 = vsyncpa [#allocation3], 1
    %243 = vsyncpa [#allocation6], 1
    %244 = vsyncpa [#allocation4], 1

</llo_original>
